<compile_context>
chip_gen: v7x
topology: tpu7x:2x2x1
jax: 0.10.0
libtpu: 0.0.40
codegen_flags: <defaults>
</compile_context>

<pallas_src>
import jax
import jax.numpy as jnp
from jax import lax
from jax.experimental import pallas as pl
from jax.experimental.pallas import tpu as pltpu


def _downsample_kernel(x_ref, w1_ref, b1_ref, w2_ref, b2_ref, o_ref):
    # x_ref : (1, 1, TH+1, Wo+1, 4*Cin) bf16  space-to-depth row tile (+1 halo row)
    # w1_ref: (16*Cin, 512)             bf16  conv1 weights, 2x2 taps fused along K
    # b1_ref: (1, 512)                  f32
    # w2_ref: (512, Cout)               bf16  1x1 conv weights
    # b2_ref: (1, Cout)                 f32
    # o_ref : (1, TH*Wo, Cout)          bf16
    th = x_ref.shape[2] - 1          # rows of output computed this step
    wo = x_ref.shape[3] - 1          # output width
    c4 = x_ref.shape[4]              # 4*Cin
    m = th * wo                      # batched M for both matmuls

    # Assemble the fused-K LHS from the four shifted (dh, dw) taps of the
    # space-to-depth grid — all slices come straight from VMEM (no HBM im2col).
    taps = []
    for dh in (0, 1):
        for dw in (0, 1):
            taps.append(
                x_ref[0, 0, pl.ds(dh, th), pl.ds(dw, wo), :].reshape(m, c4))
    lhs = jnp.concatenate(taps, axis=-1)                     # (M, 16*Cin) bf16

    acc = jnp.dot(lhs, w1_ref[...],
                  preferred_element_type=jnp.float32)        # (M, 512) f32
    # bias + ReLU in f32, then drop to bf16 right away (it is consumed as bf16).
    h = jnp.maximum(acc + b1_ref[...], 0.0).astype(jnp.bfloat16)
    y = jnp.dot(h, w2_ref[...],
                preferred_element_type=jnp.float32) + b2_ref[...]   # (M, Cout) f32
    o_ref[0] = y.astype(o_ref.dtype)


def _pick_row_tile(ho, wo, max_m=512):
    """Largest divisor TH of Ho with TH*Wo <= max_m (and layout-friendly M)."""
    best = None
    for th in range(1, ho + 1):
        if ho % th:
            continue
        if th != ho and (th * wo) % 8 != 0:   # keep M sublane-aligned when nT > 1
            continue
        if best is None or th * wo <= max_m:
            best = th
    return best


def downsample_pallas(x_nchw, w1_hwio, b1, w2, b2):
    """Forward pass of Downsample.

    x_nchw : [N, Cin, H, W]   (H, W even)
    w1_hwio: [4, 4, Cin, 512]
    b1     : [512]
    w2     : [512, Cout]
    b2     : [Cout]
    returns: [N, Cout, H//2, W//2]
    """
    N, Cin, H, W = x_nchw.shape
    assert H % 2 == 0 and W % 2 == 0, "H and W must be even (k=4, s=2, p=1 conv)"
    Ho, Wo = H // 2, W // 2
    Hid = w1_hwio.shape[-1]
    Cout = w2.shape[-1]
    C4 = 4 * Cin
    K1 = 4 * C4                      # fused K = 16*Cin
    Hp2, Wp2 = Ho + 1, Wo + 1

    TH = _pick_row_tile(Ho, Wo)
    nT = Ho // TH
    M = TH * Wo

    # ---- layout glue (no 4x patch duplication) -----------------------------------
    x_nhwc = jnp.transpose(x_nchw, (0, 2, 3, 1))
    xp = jnp.pad(x_nhwc, ((0, 0), (1, 1), (1, 1), (0, 0)))
    # space-to-depth factor 2: same total bytes as the padded input.
    xs2d = xp.reshape(N, Hp2, 2, Wp2, 2, Cin)
    xs2d = jnp.transpose(xs2d, (0, 1, 3, 2, 4, 5)).reshape(N, Hp2, Wp2, C4)
    xs2d = xs2d.astype(jnp.bfloat16)

    # Row tiles with a 1-row halo: (N, nT, TH+1, Wp2, C4); duplication = (TH+1)/TH.
    if nT == 1:
        xt = xs2d[:, None]
    else:
        row_idx = (jnp.arange(nT) * TH)[:, None] + jnp.arange(TH + 1)[None, :]
        xt = xs2d[:, row_idx]

    # conv1 weights regrouped per 2x2 tap (dh, dw) of the s2d grid and fused along K:
    # K index = (dh*2+dw)*4*Cin + (dr*2+dc)*Cin + c  with  kh = 2*dh+dr, kw = 2*dw+dc.
    w1s = w1_hwio.reshape(2, 2, 2, 2, Cin, Hid)            # (dh, dr, dw, dc, c, f)
    w1f = jnp.transpose(w1s, (0, 2, 1, 3, 4, 5)).reshape(K1, Hid).astype(jnp.bfloat16)
    b1r = b1.reshape(1, Hid).astype(jnp.float32)
    w2b = w2.astype(jnp.bfloat16)
    b2r = b2.reshape(1, Cout).astype(jnp.float32)

    flops = 2 * N * Ho * Wo * (K1 * Hid + Hid * Cout)
    bytes_accessed = (xt.size * 2 + w1f.size * 2 + w2b.size * 2
                      + b1r.size * 4 + b2r.size * 4 + N * Ho * Wo * Cout * 2)

    out = pl.pallas_call(
        _downsample_kernel,
        out_shape=jax.ShapeDtypeStruct((N, Ho * Wo, Cout), jnp.bfloat16),
        grid_spec=pltpu.PrefetchScalarGridSpec(
            num_scalar_prefetch=0,
            grid=(N, nT),
            in_specs=[
                # one halo'd row tile of the space-to-depth image per grid step
                pl.BlockSpec((1, 1, TH + 1, Wp2, C4), lambda n, t: (n, t, 0, 0, 0)),
                # weights / biases: constant index maps -> DMA'd once, stay resident
                pl.BlockSpec((K1, Hid), lambda n, t: (0, 0)),
                pl.BlockSpec((1, Hid), lambda n, t: (0, 0)),
                pl.BlockSpec((Hid, Cout), lambda n, t: (0, 0)),
                pl.BlockSpec((1, Cout), lambda n, t: (0, 0)),
            ],
            out_specs=pl.BlockSpec((1, M, Cout), lambda n, t: (n, t, 0)),
        ),
        compiler_params=pltpu.CompilerParams(
            dimension_semantics=("parallel", "parallel"),
            vmem_limit_bytes=48 * 1024 * 1024),
        cost_estimate=pl.CostEstimate(flops=flops, transcendentals=0,
                                      bytes_accessed=int(bytes_accessed)),
    )(xt, w1f, b1r, w2b, b2r)

    y = out.reshape(N, Ho, Wo, Cout).astype(x_nchw.dtype)
    return jnp.transpose(y, (0, 3, 1, 2))                  # back to NCHW


def _reference(x_nchw, w1_hwio, b1, w2, b2):
    """Pure-JAX f32 reference (lax conv) for correctness check."""
    x_nhwc = jnp.transpose(x_nchw, (0, 2, 3, 1))
    h = lax.conv_general_dilated(
        x_nhwc, w1_hwio, window_strides=(2, 2),
        padding=((1, 1), (1, 1)),
        dimension_numbers=('NHWC', 'HWIO', 'NHWC'))
    h = jnp.maximum(h + b1.reshape(1, 1, 1, -1), 0.0)
    y = jnp.einsum('nhwc,cd->nhwd', h, w2) + b2.reshape(1, 1, 1, -1)
    return jnp.transpose(y, (0, 3, 1, 2))


if __name__ == "__main__":
    # Small shapes consistent with the module's forward.
    N, Cin, H, W = 2, 4, 16, 16
    Hid, Cout = 512, 8

    key = jax.random.PRNGKey(0)
    kx, kw1, kb1, kw2, kb2 = jax.random.split(key, 5)

    x = jax.random.normal(kx, (N, Cin, H, W), dtype=jnp.float32)
    w1 = jax.random.normal(kw1, (4, 4, Cin, Hid), dtype=jnp.float32) * 0.05
    b1 = jax.random.normal(kb1, (Hid,), dtype=jnp.float32) * 0.05
    w2 = jax.random.normal(kw2, (Hid, Cout), dtype=jnp.float32) * 0.05
    b2 = jax.random.normal(kb2, (Cout,), dtype=jnp.float32) * 0.05

    fwd = jax.jit(downsample_pallas)
    out = jax.block_until_ready(fwd(x, w1, b1, w2, b2))

    ref = _reference(x, w1, b1, w2, b2)
    assert out.shape == (N, Cout, H // 2, W // 2), out.shape
    max_err = float(jnp.max(jnp.abs(out - ref)))
    # bf16 MXU operands + bf16 output store vs f32 reference -> loosened tolerance.
    assert max_err < 4e-2, f"mismatch vs reference: max abs err {max_err}"

    print("KERNEL_OK")
</pallas_src>

<mosaic_0001>
module attributes {stable_mosaic.version = 11 : i64} {
  func.func @_downsample_kernel(%arg0: i32, %arg1: i32, %arg2: memref<1x1x9x9x16xbf16, #tpu.memory_space<vmem>>, %arg3: memref<64x512xbf16, #tpu.memory_space<vmem>>, %arg4: memref<1x512xf32, #tpu.memory_space<vmem>>, %arg5: memref<512x8xbf16, #tpu.memory_space<vmem>>, %arg6: memref<1x8xf32, #tpu.memory_space<vmem>>, %arg7: memref<1x64x8xbf16, #tpu.memory_space<vmem>>) attributes {dimension_semantics = [#tpu.dimension_semantics<parallel>, #tpu.dimension_semantics<parallel>], iteration_bounds = array<i64: 2, 1>, scalar_prefetch = 0 : i64, scratch_operands = 0 : i64, tpu.core_type = #tpu.core_type<tc>, window_params = [{transform_indices = @transform_0, window_bounds = array<i64: 1, 1, 9, 9, 16>}, {pipeline_mode = #tpu.pipeline_mode<synchronous>, transform_indices = @transform_1, window_bounds = array<i64: 64, 512>}, {pipeline_mode = #tpu.pipeline_mode<synchronous>, transform_indices = @transform_2, window_bounds = array<i64: 1, 512>}, {pipeline_mode = #tpu.pipeline_mode<synchronous>, transform_indices = @transform_3, window_bounds = array<i64: 512, 8>}, {pipeline_mode = #tpu.pipeline_mode<synchronous>, transform_indices = @transform_4, window_bounds = array<i64: 1, 8>}, {transform_indices = @transform_5, window_bounds = array<i64: 1, 64, 8>}]} {
    %c0 = arith.constant 0 : index
    %c0_0 = arith.constant 0 : index
    %c0_1 = arith.constant 0 : index
    %c0_2 = arith.constant 0 : index
    %c0_3 = arith.constant 0 : index
    %0 = vector.load %arg2[%c0, %c0_0, %c0_1, %c0_2, %c0_3] : memref<1x1x9x9x16xbf16, #tpu.memory_space<vmem>>, vector<1x1x8x8x16xbf16>
    %1 = vector.shape_cast %0 : vector<1x1x8x8x16xbf16> to vector<8x8x16xbf16>
    %2 = vector.shape_cast %1 : vector<8x8x16xbf16> to vector<64x16xbf16>
    %c0_4 = arith.constant 0 : index
    %c0_5 = arith.constant 0 : index
    %c0_6 = arith.constant 0 : index
    %c1 = arith.constant 1 : index
    %c0_7 = arith.constant 0 : index
    %3 = vector.load %arg2[%c0_4, %c0_5, %c0_6, %c1, %c0_7] : memref<1x1x9x9x16xbf16, #tpu.memory_space<vmem>>, vector<1x1x8x8x16xbf16>
    %4 = vector.shape_cast %3 : vector<1x1x8x8x16xbf16> to vector<8x8x16xbf16>
    %5 = vector.shape_cast %4 : vector<8x8x16xbf16> to vector<64x16xbf16>
    %c0_8 = arith.constant 0 : index
    %c0_9 = arith.constant 0 : index
    %c1_10 = arith.constant 1 : index
    %c0_11 = arith.constant 0 : index
    %c0_12 = arith.constant 0 : index
    %6 = vector.load %arg2[%c0_8, %c0_9, %c1_10, %c0_11, %c0_12] : memref<1x1x9x9x16xbf16, #tpu.memory_space<vmem>>, vector<1x1x8x8x16xbf16>
    %7 = vector.shape_cast %6 : vector<1x1x8x8x16xbf16> to vector<8x8x16xbf16>
    %8 = vector.shape_cast %7 : vector<8x8x16xbf16> to vector<64x16xbf16>
    %c0_13 = arith.constant 0 : index
    %c0_14 = arith.constant 0 : index
    %c1_15 = arith.constant 1 : index
    %c1_16 = arith.constant 1 : index
    %c0_17 = arith.constant 0 : index
    %9 = vector.load %arg2[%c0_13, %c0_14, %c1_15, %c1_16, %c0_17] : memref<1x1x9x9x16xbf16, #tpu.memory_space<vmem>>, vector<1x1x8x8x16xbf16>
    %10 = vector.shape_cast %9 : vector<1x1x8x8x16xbf16> to vector<8x8x16xbf16>
    %11 = vector.shape_cast %10 : vector<8x8x16xbf16> to vector<64x16xbf16>
    %12 = tpu.concatenate %2, %5, %8, %11 in 1 : vector<64x16xbf16>, vector<64x16xbf16>, vector<64x16xbf16>, vector<64x16xbf16> -> vector<64x64xbf16>
    %c0_18 = arith.constant 0 : index
    %c0_19 = arith.constant 0 : index
    %13 = vector.load %arg3[%c0_18, %c0_19] : memref<64x512xbf16, #tpu.memory_space<vmem>>, vector<64x512xbf16>
    %cst = arith.constant dense<0.000000e+00> : vector<64x512xf32>
    %14 = tpu.matmul %12, %13, %cst {dimension_numbers = #tpu.dot_dimension_numbers<[1], [0], [0], [1], [0, 0, 1, 1], [], []>} : vector<64x64xbf16>, vector<64x512xbf16>, vector<64x512xf32> -> vector<64x512xf32>
    %c0_20 = arith.constant 0 : index
    %c0_21 = arith.constant 0 : index
    %15 = vector.load %arg4[%c0_20, %c0_21] : memref<1x512xf32, #tpu.memory_space<vmem>>, vector<1x512xf32>
    %16 = vector.broadcast %15 : vector<1x512xf32> to vector<64x512xf32>
    %17 = arith.addf %14, %16 : vector<64x512xf32>
    %cst_22 = arith.constant 0.000000e+00 : f32
    %18 = vector.broadcast %cst_22 : f32 to vector<64x512xf32>
    %19 = arith.maximumf %17, %18 : vector<64x512xf32>
    %20 = arith.truncf %19 : vector<64x512xf32> to vector<64x512xbf16>
    %c0_23 = arith.constant 0 : index
    %c0_24 = arith.constant 0 : index
    %21 = vector.load %arg5[%c0_23, %c0_24] : memref<512x8xbf16, #tpu.memory_space<vmem>>, vector<512x8xbf16>
    %cst_25 = arith.constant dense<0.000000e+00> : vector<64x8xf32>
    %22 = tpu.matmul %20, %21, %cst_25 {dimension_numbers = #tpu.dot_dimension_numbers<[1], [0], [0], [1], [0, 0, 1, 1], [], []>} : vector<64x512xbf16>, vector<512x8xbf16>, vector<64x8xf32> -> vector<64x8xf32>
    %c0_26 = arith.constant 0 : index
    %c0_27 = arith.constant 0 : index
    %23 = vector.load %arg6[%c0_26, %c0_27] : memref<1x8xf32, #tpu.memory_space<vmem>>, vector<1x8xf32>
    %24 = vector.broadcast %23 : vector<1x8xf32> to vector<64x8xf32>
    %25 = arith.addf %22, %24 : vector<64x8xf32>
    %26 = arith.truncf %25 : vector<64x8xf32> to vector<64x8xbf16>
    %c0_28 = arith.constant 0 : index
    %c0_29 = arith.constant 0 : index
    %c0_30 = arith.constant 0 : index
    %27 = vector.load %arg7[%c0_28, %c0_29, %c0_30] : memref<1x64x8xbf16, #tpu.memory_space<vmem>>, vector<1x64x8xbf16>
    %28 = vector.shape_cast %27 : vector<1x64x8xbf16> to vector<64x8xbf16>
    %29 = vector.shape_cast %26 : vector<64x8xbf16> to vector<1x64x8xbf16>
    tpu.vector_store %arg7[%c0_28, %c0_29, %c0_30], %29 {strides = array<i32>} : memref<1x64x8xbf16, #tpu.memory_space<vmem>>, vector<1x64x8xbf16>,
    return
  }
  func.func @transform_0(%arg0: i32, %arg1: i32) -> (i32, i32, i32, i32, i32) {
    %c0_i32 = arith.constant 0 : i32
    %c0_i32_0 = arith.constant 0 : i32
    %c0_i32_1 = arith.constant 0 : i32
    %c0_i32_2 = arith.constant 0 : i32
    return %arg0, %arg1, %c0_i32, %c0_i32_0, %c0_i32_1 : i32, i32, i32, i32, i32
  }
  func.func @transform_1(%arg0: i32, %arg1: i32) -> (i32, i32) {
    %c0_i32 = arith.constant 0 : i32
    %c0_i32_0 = arith.constant 0 : i32
    %c0_i32_1 = arith.constant 0 : i32
    return %c0_i32, %c0_i32_0 : i32, i32
  }
  func.func @transform_2(%arg0: i32, %arg1: i32) -> (i32, i32) {
    %c0_i32 = arith.constant 0 : i32
    %c0_i32_0 = arith.constant 0 : i32
    %c0_i32_1 = arith.constant 0 : i32
    return %c0_i32, %c0_i32_0 : i32, i32
  }
  func.func @transform_3(%arg0: i32, %arg1: i32) -> (i32, i32) {
    %c0_i32 = arith.constant 0 : i32
    %c0_i32_0 = arith.constant 0 : i32
    %c0_i32_1 = arith.constant 0 : i32
    return %c0_i32, %c0_i32_0 : i32, i32
  }
  func.func @transform_4(%arg0: i32, %arg1: i32) -> (i32, i32) {
    %c0_i32 = arith.constant 0 : i32
    %c0_i32_0 = arith.constant 0 : i32
    %c0_i32_1 = arith.constant 0 : i32
    return %c0_i32, %c0_i32_0 : i32, i32
  }
  func.func @transform_5(%arg0: i32, %arg1: i32) -> (i32, i32, i32) {
    %c0_i32 = arith.constant 0 : i32
    %c0_i32_0 = arith.constant 0 : i32
    return %arg0, %arg1, %c0_i32 : i32, i32, i32
  }
}

</mosaic_0001>

<llo_original>
// kernel: downsample_pallas.1
$region0: #{downsample_pallas.1}
  #allocation0 [shape = 'u32[]', space=smem, size = 0x4, offset = 0x4, fixed_abs, tag = 'smem constant byte address 0x4 - core index']
  #allocation1 [shape = 'u32[144,128]{1,0:T(1,128)}', space=vmem, size = 0x12000, scoped, tag = 'internal scratch']
  %s0 = inlined_call_operand.vmem [shape: bf16[2,1,9,9,16], index: 0, kind: input, shape index: {}]
  %s1 = inlined_call_operand.vmem [shape: bf16[64,512], index: 1, kind: input, shape index: {}]
  %s2 = inlined_call_operand.vmem [shape: f32[1,512], index: 2, kind: input, shape index: {}]
  %s3 = inlined_call_operand.vmem [shape: bf16[512,8], index: 3, kind: input, shape index: {}]
  %s4 = inlined_call_operand.vmem [shape: f32[1,8], index: 4, kind: input, shape index: {}]
  %s5 = inlined_call_operand.vmem [shape: bf16[2,64,8], index: 5, kind: output, shape index: {}]
  %s6 = sld [smem:[#allocation0]]
  $region53: #{downsample_pallas.1} parent=0
    _
  %s8 = ssub.s32 1, %s6
  %s9 = scalar_select 0, %s8, %s6
  loop: start=0, step=1, limit=4
  $region2: #{downsample_pallas.1} parent=0 // loop_pre_header
    _
  $region3: #{downsample_pallas.1} parent=0 // loop_header
    %s11 = sphi 0, %s15
    %p12 = scmp.ge.s32.totalorder %s11, 4
    %s18 = sphi 0, %s30
    %s19 = sphi 0, %s26
    %s20 = sphi 0, %s18
    %s21 = sphi 0, %s19
    %s22 = sphi 0, %s20
    %s23 = sphi 0, %s21
    %s35 = sphi 0, %s37
    %s38 = sphi 0, %s35
    %s39 = sphi 0, %s38
    %s55 = sphi 0, %s39
    %s59 = sphi 0, %s59
    %s61 = sphi 0, %s59
    %s62 = sphi 0, %s61
    %s76 = sphi 0, %s62
    %s80 = sphi 0, %s80
    %s82 = sphi 0, %s80
    %s83 = sphi 0, %s82
    %s97 = sphi 0, %s83
    %s101 = sphi 0, %s101
    %s103 = sphi 0, %s101
    %s104 = sphi 0, %s103
    %s118 = sphi 0, %s104
    %s122 = sphi 0, %s122
    %s124 = sphi 0, %s122
    %s125 = sphi 0, %s124
    %s139 = sphi 0, %s125
    %s147 = sphi 0, %s149
    %s150 = sphi 0, %s147
    %s151 = sphi 0, %s150
    %s167 = sphi 0, %s151
  $region4: #{downsample_pallas.1} parent=0 // loop_header_branch
    %14 = sbr.rel (%p12) target = $region8
  $region5: #{downsample_pallas.1} parent=0 // loop_body
    %s16 = ssub.s32 %s11, 1
    %s17 = ssub.s32 %s11, 2
    %s24 = sadd.s32 1, %s19
    %p25 = scmp.ge.s32.totalorder %s24, 1
    %s26 = scalar_select %p25, 0, %s24
    %s27 = sadd.s32 1, %s18
    %s28 = scalar_select %p25, %s27, %s18
    %p29 = scmp.ge.s32.totalorder %s28, 2
    %s30 = scalar_select %p29, 0, %s28
    %s31 = ssub.s32 %s18, %s30
    %s32 = ssub.s32 %s19, %s26
    %s33 = sor.u32 %s31, %s32
    %p34 = scmp.eq.s32.totalorder %s33, 0
    %s36 = sadd.s32 %s35, 1
    %s37 = scalar_select %p34, %s35, %s36
    %p40 = pneg %p34
    %p41 = scmp.eq.s32.totalorder %s11, 1
    %p42 = por %p40, %p41
    %p43 = scmp.ne.s32.totalorder %s35, %s38
    %p44 = scmp.eq.s32.totalorder %s11, 0
    %p45 = por %p43, %p44
    %p46 = scmp.ne.s32.totalorder %s35, %s38
    %p47 = scmp.eq.s32.totalorder %s16, 1
    %p48 = por %p46, %p47
    %p49 = scmp.ne.s32.totalorder %s38, %s39
    %p50 = scmp.eq.s32.totalorder %s16, 0
    %p51 = por %p49, %p50
    %p52 = scmp.ne.s32.totalorder %s38, %s39
    %p53 = scmp.eq.s32.totalorder %s17, 1
    %p54 = por %p52, %p53
    %p56 = scmp.ne.s32.totalorder %s39, %s55
    %p57 = scmp.eq.s32.totalorder %s17, 0
    %p58 = por %p56, %p57
    %s60 = sadd.s32 %s59, 1
    %p63 = scmp.eq.s32.totalorder %s11, 1
    %p64 = scmp.ne.s32.totalorder %s59, %s61
    %p65 = scmp.eq.s32.totalorder %s11, 0
    %p66 = por %p64, %p65
    %p67 = scmp.ne.s32.totalorder %s59, %s61
    %p68 = scmp.eq.s32.totalorder %s16, 1
    %p69 = por %p67, %p68
    %p70 = scmp.ne.s32.totalorder %s61, %s62
    %p71 = scmp.eq.s32.totalorder %s16, 0
    %p72 = por %p70, %p71
    %p73 = scmp.ne.s32.totalorder %s61, %s62
    %p74 = scmp.eq.s32.totalorder %s17, 1
    %p75 = por %p73, %p74
    %p77 = scmp.ne.s32.totalorder %s62, %s76
    %p78 = scmp.eq.s32.totalorder %s17, 0
    %p79 = por %p77, %p78
    %s81 = sadd.s32 %s80, 1
    %p84 = scmp.eq.s32.totalorder %s11, 1
    %p85 = scmp.ne.s32.totalorder %s80, %s82
    %p86 = scmp.eq.s32.totalorder %s11, 0
    %p87 = por %p85, %p86
    %p88 = scmp.ne.s32.totalorder %s80, %s82
    %p89 = scmp.eq.s32.totalorder %s16, 1
    %p90 = por %p88, %p89
    %p91 = scmp.ne.s32.totalorder %s82, %s83
    %p92 = scmp.eq.s32.totalorder %s16, 0
    %p93 = por %p91, %p92
    %p94 = scmp.ne.s32.totalorder %s82, %s83
    %p95 = scmp.eq.s32.totalorder %s17, 1
    %p96 = por %p94, %p95
    %p98 = scmp.ne.s32.totalorder %s83, %s97
    %p99 = scmp.eq.s32.totalorder %s17, 0
    %p100 = por %p98, %p99
    %s102 = sadd.s32 %s101, 1
    %p105 = scmp.eq.s32.totalorder %s11, 1
    %p106 = scmp.ne.s32.totalorder %s101, %s103
    %p107 = scmp.eq.s32.totalorder %s11, 0
    %p108 = por %p106, %p107
    %p109 = scmp.ne.s32.totalorder %s101, %s103
    %p110 = scmp.eq.s32.totalorder %s16, 1
    %p111 = por %p109, %p110
    %p112 = scmp.ne.s32.totalorder %s103, %s104
    %p113 = scmp.eq.s32.totalorder %s16, 0
    %p114 = por %p112, %p113
    %p115 = scmp.ne.s32.totalorder %s103, %s104
    %p116 = scmp.eq.s32.totalorder %s17, 1
    %p117 = por %p115, %p116
    %p119 = scmp.ne.s32.totalorder %s104, %s118
    %p120 = scmp.eq.s32.totalorder %s17, 0
    %p121 = por %p119, %p120
    %s123 = sadd.s32 %s122, 1
    %p126 = scmp.eq.s32.totalorder %s11, 1
    %p127 = scmp.ne.s32.totalorder %s122, %s124
    %p128 = scmp.eq.s32.totalorder %s11, 0
    %p129 = por %p127, %p128
    %p130 = scmp.ne.s32.totalorder %s122, %s124
    %p131 = scmp.eq.s32.totalorder %s16, 1
    %p132 = por %p130, %p131
    %p133 = scmp.ne.s32.totalorder %s124, %s125
    %p134 = scmp.eq.s32.totalorder %s16, 0
    %p135 = por %p133, %p134
    %p136 = scmp.ne.s32.totalorder %s124, %s125
    %p137 = scmp.eq.s32.totalorder %s17, 1
    %p138 = por %p136, %p137
    %p140 = scmp.ne.s32.totalorder %s125, %s139
    %p141 = scmp.eq.s32.totalorder %s17, 0
    %p142 = por %p140, %p141
    %s143 = ssub.s32 %s18, %s30
    %s144 = ssub.s32 %s19, %s26
    %s145 = sor.u32 %s143, %s144
    %p146 = scmp.eq.s32.totalorder %s145, 0
    %s148 = sadd.s32 %s147, 1
    %s149 = scalar_select %p146, %s147, %s148
    %p152 = pneg %p146
    %p153 = scmp.eq.s32.totalorder %s11, 1
    %p154 = por %p152, %p153
    %p155 = scmp.ne.s32.totalorder %s147, %s150
    %p156 = scmp.eq.s32.totalorder %s11, 0
    %p157 = por %p155, %p156
    %p158 = scmp.ne.s32.totalorder %s147, %s150
    %p159 = scmp.eq.s32.totalorder %s16, 1
    %p160 = por %p158, %p159
    %p161 = scmp.ne.s32.totalorder %s150, %s151
    %p162 = scmp.eq.s32.totalorder %s16, 0
    %p163 = por %p161, %p162
    %p164 = scmp.ne.s32.totalorder %s150, %s151
    %p165 = scmp.eq.s32.totalorder %s17, 1
    %p166 = por %p164, %p165
    %p168 = scmp.ne.s32.totalorder %s151, %s167
    %p169 = scmp.eq.s32.totalorder %s17, 0
    %p170 = por %p168, %p169
    %p171 = scmp.le.s32.totalorder 1, %s11
    %p172 = scmp.lt.s32.totalorder %s11, 3
    %p173 = pnand %p171, %p172
    %p174 = pneg %p173
    // Predicated region
    $region9: #{downsample_pallas.1} parent=5 // pred_check
      _
    $region10: #{downsample_pallas.1} parent=5 // pred_check_branch
      %176 = sbr.rel (%p173) target = $region12
    $region11: #{downsample_pallas.1} parent=5 // pred_region
      %s177 = ssub.s32 %s11, 1
      // Predicated region
      $region13: #{downsample_pallas.1} parent=11 // pred_check
        %p178 = pneg %p72
      $region14: #{downsample_pallas.1} parent=11 // pred_check_branch
        %180 = sbr.rel (%p178) target = $region16
      $region15: #{downsample_pallas.1} parent=11 // pred_region
        _
      $region16: #{downsample_pallas.1} parent=11 // pred_fallthru
        _
      // Predicated region
      $region17: #{downsample_pallas.1} parent=11 // pred_check
        %p181 = pneg %p93
      $region18: #{downsample_pallas.1} parent=11 // pred_check_branch
        %183 = sbr.rel (%p181) target = $region20
      $region19: #{downsample_pallas.1} parent=11 // pred_region
        _
      $region20: #{downsample_pallas.1} parent=11 // pred_fallthru
        _
      // Predicated region
      $region21: #{downsample_pallas.1} parent=11 // pred_check
        %p184 = pneg %p114
      $region22: #{downsample_pallas.1} parent=11 // pred_check_branch
        %186 = sbr.rel (%p184) target = $region24
      $region23: #{downsample_pallas.1} parent=11 // pred_region
        _
      $region24: #{downsample_pallas.1} parent=11 // pred_fallthru
        _
      // Predicated region
      $region25: #{downsample_pallas.1} parent=11 // pred_check
        %p187 = pneg %p135
      $region26: #{downsample_pallas.1} parent=11 // pred_check_branch
        %189 = sbr.rel (%p187) target = $region28
      $region27: #{downsample_pallas.1} parent=11 // pred_region
        _
      $region28: #{downsample_pallas.1} parent=11 // pred_fallthru
        _
    $region12: #{downsample_pallas.1} parent=5 // pred_fallthru
      _
    %p190 = scmp.lt.s32.totalorder %s11, 2
    // Predicated region
    $region29: #{downsample_pallas.1} parent=5 // pred_check
      %p191 = pneg %p190
    $region30: #{downsample_pallas.1} parent=5 // pred_check_branch
      %193 = sbr.rel (%p191) target = $region32
    $region31: #{downsample_pallas.1} parent=5 // pred_region
      // Predicated region
      $region33: #{downsample_pallas.1} parent=31 // pred_check
        %p194 = pneg %p45
      $region34: #{downsample_pallas.1} parent=31 // pred_check_branch
        %196 = sbr.rel (%p194) target = $region36
      $region35: #{downsample_pallas.1} parent=31 // pred_region
        %p197 = scmp.lt.s32.totalorder %s18, 1
        %s198 = scalar_select %p197, %s18, 1
        %p199 = scmp.lt.s32.totalorder %s19, 0
        %s200 = scalar_select %p199, %s19, 0
        %s201 = smul.addr %s200, 18
        %s202 = smul.addr %s198, 18
        %s203 = sadd.s32 %s201, %s202
        %s204 = smul.addr %s203, 4
        %s205 = scalar_lea.vmem %s0, %s204
      $region36: #{downsample_pallas.1} parent=31 // pred_fallthru
        _
    $region32: #{downsample_pallas.1} parent=5 // pred_fallthru
      _
    %p206 = scmp.le.s32.totalorder 1, %s11
    %p207 = scmp.lt.s32.totalorder %s11, 3
    %p208 = pnand %p206, %p207
    %p209 = pneg %p208
    // Predicated region
    $region37: #{downsample_pallas.1} parent=5 // pred_check
      _
    $region38: #{downsample_pallas.1} parent=5 // pred_check_branch
      %211 = sbr.rel (%p208) target = $region40
    $region39: #{downsample_pallas.1} parent=5 // pred_region
      %s212 = ssub.s32 %s11, 1
      %p213 = scmp.lt.s32.totalorder %s20, 1
      %s214 = scalar_select %p213, %s20, 1
      %p215 = scmp.lt.s32.totalorder %s21, 0
      %s216 = scalar_select %p215, %s21, 0
      %s217 = smul.addr %s216, 18
      %s218 = smul.addr %s214, 18
      %s219 = sadd.s32 %s217, %s218
      %s220 = smul.addr %s219, 4
      %s221 = scalar_lea.vmem %s0, %s220
      %p222 = pneg %p51
      %p223 = pneg %p48
      %p224 = pneg %p72
      %p225 = pneg %p69
      %p226 = pneg %p93
      %p227 = pneg %p90
      %p228 = pneg %p114
      %p229 = pneg %p111
      %p230 = pneg %p135
      %p231 = pneg %p132
      %p232 = pneg %p163
      %p233 = pneg %p160
      %s234 = smul.u32 8, %s21
      %p235 = scmp.lt.s32.totalorder %s20, 1
      %s236 = scalar_select %p235, %s20, 1
      %p237 = scmp.lt.s32.totalorder %s234, 7
      %s238 = scalar_select %p237, %s234, 7
      %s239 = smul.addr %s236, 8
      %s240 = sadd.s32 %s238, %s239
      %s241 = smul.addr %s240, 4
      %s242 = scalar_lea.vmem %s5, %s241
      %p243 = scmp.lt.s32.totalorder %s20, 1
      %s244 = scalar_select %p243, %s20, 1
      %p245 = scmp.lt.s32.totalorder %s21, 0
      %s246 = scalar_select %p245, %s21, 0
      %s247 = smul.addr %s246, 18
      %s248 = smul.addr %s244, 18
      %s249 = sadd.s32 %s247, %s248
      %s250 = smul.addr %s249, 4
      %s251 = scalar_lea.vmem %s0, %s250
      %s252 = smul.u32 8, %s21
      %p253 = scmp.lt.s32.totalorder %s20, 1
      %s254 = scalar_select %p253, %s20, 1
      %p255 = scmp.lt.s32.totalorder %s252, 7
      %s256 = scalar_select %p255, %s252, 7
      %s257 = smul.addr %s254, 8
      %s258 = sadd.s32 %s256, %s257
      %s259 = smul.addr %s258, 4
      %s260 = scalar_lea.vmem %s5, %s259
      %s261 = smul.u32 8, %s21
      %v263 = vld [vmem:[%s251] sm:$0xf]
      %v264 = vld [vmem:[%s251 + $0x8] sm:$0xf]
      %v265 = vld [vmem:[%s251 + $0x10] sm:$0xf]
      %v266 = vld [vmem:[%s251 + $0x18] sm:$0xf]
      %v267 = vld [vmem:[%s251 + $0x20] sm:$0xf]
      %v268 = vld [vmem:[%s251 + $0x28] sm:$0xf]
      %v269 = vld [vmem:[%s251 + $0x30] sm:$0xf]
      %v270 = vld [vmem:[%s251 + $0x38] sm:$0xf]
      %v271 = vld [vmem:[%s251 + $0x4] sm:$0x1]
      %v272 = vld [vmem:[%s251 + $0xc] sm:$0x1]
      %v273 = vld [vmem:[%s251 + $0x14] sm:$0x1]
      %v274 = vld [vmem:[%s251 + $0x1c] sm:$0x1]
      %v275 = vld [vmem:[%s251 + $0x24] sm:$0x1]
      %v276 = vld [vmem:[%s251 + $0x2c] sm:$0x1]
      %v277 = vld [vmem:[%s251 + $0x34] sm:$0x1]
      %v278 = vld [vmem:[%s251 + $0x3c] sm:$0x1]
      %vm279 = vsmask.f32 3328
      %vm280 = vsmask.f32 7440
      %vm281 = vmor %vm279, %vm280
      %v283 = vshrl.u32 %v263, 16
      %v285 = vrot.slane %v283, 4
      %v286 = vshll.u32 %v263, 16
      %v288 = vrot.slane %v286, 5
      %v289 = vor.u32 %v285, %v288
      %v290 = vrot.slane %v289, 4
      %v292 = vshll.u32 %v271, 16
      %v294 = vrot.slane %v292, 5
      %v295 = vsel %vm281, %v290, %v294
      %v297 = vshrl.u32 %v264, 16
      %v299 = vrot.slane %v297, 4
      %v300 = vshll.u32 %v264, 16
      %v302 = vrot.slane %v300, 5
      %v303 = vor.u32 %v299, %v302
      %v304 = vrot.slane %v303, 4
      %v306 = vshll.u32 %v272, 16
      %v308 = vrot.slane %v306, 5
      %v309 = vsel %vm281, %v304, %v308
      %v311 = vshrl.u32 %v265, 16
      %v313 = vrot.slane %v311, 4
      %v314 = vshll.u32 %v265, 16
      %v316 = vrot.slane %v314, 5
      %v317 = vor.u32 %v313, %v316
      %v318 = vrot.slane %v317, 4
      %v320 = vshll.u32 %v273, 16
      %v322 = vrot.slane %v320, 5
      %v323 = vsel %vm281, %v318, %v322
      %v325 = vshrl.u32 %v266, 16
      %v327 = vrot.slane %v325, 4
      %v328 = vshll.u32 %v266, 16
      %v330 = vrot.slane %v328, 5
      %v331 = vor.u32 %v327, %v330
      %v332 = vrot.slane %v331, 4
      %v334 = vshll.u32 %v274, 16
      %v336 = vrot.slane %v334, 5
      %v337 = vsel %vm281, %v332, %v336
      %v339 = vshrl.u32 %v267, 16
      %v341 = vrot.slane %v339, 4
      %v342 = vshll.u32 %v267, 16
      %v344 = vrot.slane %v342, 5
      %v345 = vor.u32 %v341, %v344
      %v346 = vrot.slane %v345, 4
      %v348 = vshll.u32 %v275, 16
      %v350 = vrot.slane %v348, 5
      %v351 = vsel %vm281, %v346, %v350
      %v353 = vshrl.u32 %v268, 16
      %v355 = vrot.slane %v353, 4
      %v356 = vshll.u32 %v268, 16
      %v358 = vrot.slane %v356, 5
      %v359 = vor.u32 %v355, %v358
      %v360 = vrot.slane %v359, 4
      %v362 = vshll.u32 %v276, 16
      %v364 = vrot.slane %v362, 5
      %v365 = vsel %vm281, %v360, %v364
      %v367 = vshrl.u32 %v269, 16
      %v369 = vrot.slane %v367, 4
      %v370 = vshll.u32 %v269, 16
      %v372 = vrot.slane %v370, 5
      %v373 = vor.u32 %v369, %v372
      %v374 = vrot.slane %v373, 4
      %v376 = vshll.u32 %v277, 16
      %v378 = vrot.slane %v376, 5
      %v379 = vsel %vm281, %v374, %v378
      %v381 = vshrl.u32 %v270, 16
      %v383 = vrot.slane %v381, 4
      %v384 = vshll.u32 %v270, 16
      %v386 = vrot.slane %v384, 5
      %v387 = vor.u32 %v383, %v386
      %v388 = vrot.slane %v387, 4
      %v390 = vshll.u32 %v278, 16
      %v392 = vrot.slane %v390, 5
      %v393 = vsel %vm281, %v388, %v392
      %s394 = scalar_lea.vmem %s251, 8
      %v395 = vld [vmem:[%s394] sm:$0xf]
      %v396 = vld [vmem:[%s394 + $0x8] sm:$0xf]
      %v397 = vld [vmem:[%s394 + $0x10] sm:$0xf]
      %v398 = vld [vmem:[%s394 + $0x18] sm:$0xf]
      %v399 = vld [vmem:[%s394 + $0x20] sm:$0xf]
      %v400 = vld [vmem:[%s394 + $0x28] sm:$0xf]
      %v401 = vld [vmem:[%s394 + $0x30] sm:$0xf]
      %v402 = vld [vmem:[%s394 + $0x38] sm:$0xf]
      %v403 = vld [vmem:[%s394 + $0x4] sm:$0x1]
      %v404 = vld [vmem:[%s394 + $0xc] sm:$0x1]
      %v405 = vld [vmem:[%s394 + $0x14] sm:$0x1]
      %v406 = vld [vmem:[%s394 + $0x1c] sm:$0x1]
      %v407 = vld [vmem:[%s394 + $0x24] sm:$0x1]
      %v408 = vld [vmem:[%s394 + $0x2c] sm:$0x1]
      %v409 = vld [vmem:[%s394 + $0x34] sm:$0x1]
      %v410 = vld [vmem:[%s394 + $0x3c] sm:$0x1]
      %v412 = vshrl.u32 %v395, 16
      %v414 = vrot.slane %v412, 4
      %v415 = vshll.u32 %v395, 16
      %v417 = vrot.slane %v415, 5
      %v418 = vor.u32 %v414, %v417
      %v419 = vrot.slane %v418, 4
      %v421 = vshll.u32 %v403, 16
      %v423 = vrot.slane %v421, 5
      %v424 = vsel %vm281, %v419, %v423
      %v426 = vshrl.u32 %v396, 16
      %v428 = vrot.slane %v426, 4
      %v429 = vshll.u32 %v396, 16
      %v431 = vrot.slane %v429, 5
      %v432 = vor.u32 %v428, %v431
      %v433 = vrot.slane %v432, 4
      %v435 = vshll.u32 %v404, 16
      %v437 = vrot.slane %v435, 5
      %v438 = vsel %vm281, %v433, %v437
      %v440 = vshrl.u32 %v397, 16
      %v442 = vrot.slane %v440, 4
      %v443 = vshll.u32 %v397, 16
      %v445 = vrot.slane %v443, 5
      %v446 = vor.u32 %v442, %v445
      %v447 = vrot.slane %v446, 4
      %v449 = vshll.u32 %v405, 16
      %v451 = vrot.slane %v449, 5
      %v452 = vsel %vm281, %v447, %v451
      %v454 = vshrl.u32 %v398, 16
      %v456 = vrot.slane %v454, 4
      %v457 = vshll.u32 %v398, 16
      %v459 = vrot.slane %v457, 5
      %v460 = vor.u32 %v456, %v459
      %v461 = vrot.slane %v460, 4
      %v463 = vshll.u32 %v406, 16
      %v465 = vrot.slane %v463, 5
      %v466 = vsel %vm281, %v461, %v465
      %v468 = vshrl.u32 %v399, 16
      %v470 = vrot.slane %v468, 4
      %v471 = vshll.u32 %v399, 16
      %v473 = vrot.slane %v471, 5
      %v474 = vor.u32 %v470, %v473
      %v475 = vrot.slane %v474, 4
      %v477 = vshll.u32 %v407, 16
      %v479 = vrot.slane %v477, 5
      %v480 = vsel %vm281, %v475, %v479
      %v482 = vshrl.u32 %v400, 16
      %v484 = vrot.slane %v482, 4
      %v485 = vshll.u32 %v400, 16
      %v487 = vrot.slane %v485, 5
      %v488 = vor.u32 %v484, %v487
      %v489 = vrot.slane %v488, 4
      %v491 = vshll.u32 %v408, 16
      %v493 = vrot.slane %v491, 5
      %v494 = vsel %vm281, %v489, %v493
      %v496 = vshrl.u32 %v401, 16
      %v498 = vrot.slane %v496, 4
      %v499 = vshll.u32 %v401, 16
      %v501 = vrot.slane %v499, 5
      %v502 = vor.u32 %v498, %v501
      %v503 = vrot.slane %v502, 4
      %v505 = vshll.u32 %v409, 16
      %v507 = vrot.slane %v505, 5
      %v508 = vsel %vm281, %v503, %v507
      %v510 = vshrl.u32 %v402, 16
      %v512 = vrot.slane %v510, 4
      %v513 = vshll.u32 %v402, 16
      %v515 = vrot.slane %v513, 5
      %v516 = vor.u32 %v512, %v515
      %v517 = vrot.slane %v516, 4
      %v519 = vshll.u32 %v410, 16
      %v521 = vrot.slane %v519, 5
      %v522 = vsel %vm281, %v517, %v521
      %v531 = vunpack.c.l.b16 %v263
      %v532 = vunpack.c.l.b16 %v264
      %v533 = vunpack.c.l.b16 %v265
      %v534 = vunpack.c.l.b16 %v266
      %v535 = vunpack.c.l.b16 %v267
      %v536 = vunpack.c.l.b16 %v268
      %v537 = vunpack.c.l.b16 %v269
      %v538 = vunpack.c.l.b16 %v270
      %v539 = vpack.c.b16 %v532, %v531
      %v540 = vpack.c.b16 %v534, %v533
      %v541 = vpack.c.b16 %v536, %v535
      %v542 = vpack.c.b16 %v538, %v537
      %v543 = vunpack.c.l.b16 %v295
      %v544 = vunpack.c.l.b16 %v309
      %v545 = vunpack.c.l.b16 %v323
      %v546 = vunpack.c.l.b16 %v337
      %v547 = vunpack.c.l.b16 %v351
      %v548 = vunpack.c.l.b16 %v365
      %v549 = vunpack.c.l.b16 %v379
      %v550 = vunpack.c.l.b16 %v393
      %v551 = vpack.c.b16 %v544, %v543
      %v552 = vpack.c.b16 %v546, %v545
      %v553 = vpack.c.b16 %v548, %v547
      %v554 = vpack.c.b16 %v550, %v549
      %555 = vrot.lane.b32.xlu0 %v551, 16
      %v556 = vpop.permute.xlu0 %555
      %557 = vrot.lane.b32.xlu0 %v552, 16
      %v558 = vpop.permute.xlu0 %557
      %559 = vrot.lane.b32.xlu0 %v553, 16
      %v560 = vpop.permute.xlu0 %559
      %561 = vrot.lane.b32.xlu0 %v554, 16
      %v562 = vpop.permute.xlu0 %561
      %v571 = vunpack.c.l.b16 %v395
      %v572 = vunpack.c.l.b16 %v396
      %v573 = vunpack.c.l.b16 %v397
      %v574 = vunpack.c.l.b16 %v398
      %v575 = vunpack.c.l.b16 %v399
      %v576 = vunpack.c.l.b16 %v400
      %v577 = vunpack.c.l.b16 %v401
      %v578 = vunpack.c.l.b16 %v402
      %v579 = vpack.c.b16 %v572, %v571
      %v580 = vpack.c.b16 %v574, %v573
      %v581 = vpack.c.b16 %v576, %v575
      %v582 = vpack.c.b16 %v578, %v577
      %583 = vrot.lane.b32.xlu0 %v579, 32
      %v584 = vpop.permute.xlu0 %583
      %585 = vrot.lane.b32.xlu0 %v580, 32
      %v586 = vpop.permute.xlu0 %585
      %587 = vrot.lane.b32.xlu0 %v581, 32
      %v588 = vpop.permute.xlu0 %587
      %589 = vrot.lane.b32.xlu0 %v582, 32
      %v590 = vpop.permute.xlu0 %589
      %v591 = vunpack.c.l.b16 %v424
      %v592 = vunpack.c.l.b16 %v438
      %v593 = vunpack.c.l.b16 %v452
      %v594 = vunpack.c.l.b16 %v466
      %v595 = vunpack.c.l.b16 %v480
      %v596 = vunpack.c.l.b16 %v494
      %v597 = vunpack.c.l.b16 %v508
      %v598 = vunpack.c.l.b16 %v522
      %v599 = vpack.c.b16 %v592, %v591
      %v600 = vpack.c.b16 %v594, %v593
      %v601 = vpack.c.b16 %v596, %v595
      %v602 = vpack.c.b16 %v598, %v597
      %603 = vrot.lane.b32.xlu0 %v599, 48
      %v604 = vpop.permute.xlu0 %603
      %605 = vrot.lane.b32.xlu0 %v600, 48
      %v606 = vpop.permute.xlu0 %605
      %607 = vrot.lane.b32.xlu0 %v601, 48
      %v608 = vpop.permute.xlu0 %607
      %609 = vrot.lane.b32.xlu0 %v602, 48
      %v610 = vpop.permute.xlu0 %609
      %vm611 = vcmask 130048
      %v614 = vsel %vm611, %v539, %v556
      %v617 = vsel %vm611, %v540, %v558
      %v620 = vsel %vm611, %v541, %v560
      %v623 = vsel %vm611, %v542, %v562
      %vm624 = vcmask 261120
      %v626 = vsel %vm624, %v614, %v584
      %v628 = vsel %vm624, %v617, %v586
      %v630 = vsel %vm624, %v620, %v588
      %v632 = vsel %vm624, %v623, %v590
      %vm633 = vcmask 392192
      %v635 = vsel %vm633, %v626, %v604
      %v637 = vsel %vm633, %v628, %v606
      %v639 = vsel %vm633, %v630, %v608
      %v641 = vsel %vm633, %v632, %v610
      %v642 = vld [vmem:[%s1] sm:$0xff]
      %v643 = vld [vmem:[%s1 + $0x8] sm:$0xff]
      %v644 = vld [vmem:[%s1 + $0x10] sm:$0xff]
      %v645 = vld [vmem:[%s1 + $0x18] sm:$0xff]
      %v646 = vld [vmem:[%s1 + $0x20] sm:$0xff]
      %v647 = vld [vmem:[%s1 + $0x28] sm:$0xff]
      %v648 = vld [vmem:[%s1 + $0x30] sm:$0xff]
      %v649 = vld [vmem:[%s1 + $0x38] sm:$0xff]
      %v650 = vld [vmem:[%s1 + $0x40] sm:$0xff]
      %v651 = vld [vmem:[%s1 + $0x48] sm:$0xff]
      %v652 = vld [vmem:[%s1 + $0x50] sm:$0xff]
      %v653 = vld [vmem:[%s1 + $0x58] sm:$0xff]
      %v654 = vld [vmem:[%s1 + $0x60] sm:$0xff]
      %v655 = vld [vmem:[%s1 + $0x68] sm:$0xff]
      %v656 = vld [vmem:[%s1 + $0x70] sm:$0xff]
      %v657 = vld [vmem:[%s1 + $0x78] sm:$0xff]
      %v658 = vld [vmem:[%s2] sm:$0xf]
      %v660 = vlaneseq
      %v661 = vshrl.u32 %v660, 7
      %v662 = vsub.s32 0, %v661
      %v663 = vrot.slane %v658, %v662
      %v664 = vlaneseq
      %v665 = vshrl.u32 %v664, 7
      %v666 = vsub.s32 1, %v665
      %v667 = vrot.slane %v658, %v666
      %v668 = vlaneseq
      %v669 = vshrl.u32 %v668, 7
      %v670 = vsub.s32 2, %v669
      %v671 = vrot.slane %v658, %v670
      %v672 = vlaneseq
      %v673 = vshrl.u32 %v672, 7
      %v674 = vsub.s32 3, %v673
      %v675 = vrot.slane %v658, %v674
      %v696 = vunpack.c.l.b16 %v642
      %v697 = vunpack.c.h.b16 %v642
      %v698 = vunpack.c.l.b16 %v643
      %v699 = vunpack.c.h.b16 %v643
      %v700 = vunpack.c.l.b16 %v644
      %v701 = vunpack.c.h.b16 %v644
      %v702 = vunpack.c.l.b16 %v645
      %v703 = vunpack.c.h.b16 %v645
      %v704 = vunpack.c.l.b16 %v646
      %v705 = vunpack.c.h.b16 %v646
      %v706 = vunpack.c.l.b16 %v647
      %v707 = vunpack.c.h.b16 %v647
      %v708 = vunpack.c.l.b16 %v648
      %v709 = vunpack.c.h.b16 %v648
      %v710 = vunpack.c.l.b16 %v649
      %v711 = vunpack.c.h.b16 %v649
      %v712 = vunpack.c.l.b16 %v650
      %v713 = vunpack.c.h.b16 %v650
      %v714 = vunpack.c.l.b16 %v651
      %v715 = vunpack.c.h.b16 %v651
      %v716 = vunpack.c.l.b16 %v652
      %v717 = vunpack.c.h.b16 %v652
      %v718 = vunpack.c.l.b16 %v653
      %v719 = vunpack.c.h.b16 %v653
      %v720 = vunpack.c.l.b16 %v654
      %v721 = vunpack.c.h.b16 %v654
      %v722 = vunpack.c.l.b16 %v655
      %v723 = vunpack.c.h.b16 %v655
      %v724 = vunpack.c.l.b16 %v656
      %v725 = vunpack.c.h.b16 %v656
      %v726 = vunpack.c.l.b16 %v657
      %v727 = vunpack.c.h.b16 %v657
      %v728 = vpack.c.b16 %v700, %v696
      %v729 = vpack.c.b16 %v701, %v697
      %v730 = vpack.c.b16 %v702, %v698
      %v731 = vpack.c.b16 %v703, %v699
      %v732 = vpack.c.b16 %v708, %v704
      %v733 = vpack.c.b16 %v709, %v705
      %v734 = vpack.c.b16 %v710, %v706
      %v735 = vpack.c.b16 %v711, %v707
      %v736 = vpack.c.b16 %v716, %v712
      %v737 = vpack.c.b16 %v717, %v713
      %v738 = vpack.c.b16 %v718, %v714
      %v739 = vpack.c.b16 %v719, %v715
      %v740 = vpack.c.b16 %v724, %v720
      %v741 = vpack.c.b16 %v725, %v721
      %v742 = vpack.c.b16 %v726, %v722
      %v743 = vpack.c.b16 %v727, %v723
      %vm760 = vcmask 523264
      %v761 = vsel %vm760, %v635, 0
      %v763 = vsel %vm760, %v637, 0
      %v765 = vsel %vm760, %v639, 0
      %v767 = vsel %vm760, %v641, 0
      %769 = vmatprep.subr.bf16.mxu0 %v729
      %770 = vmatpush1.bf16.msra.mxu0 %v728
      %771 = vmatprep.subr.bf16.mxu0 %v733
      %772 = vmatpush1.bf16.msra.mxu0 %v732
      %773 = vmatprep.subr.bf16.mxu0 %v737
      %774 = vmatpush1.bf16.msra.mxu0 %v736
      %775 = vmatprep.subr.bf16.mxu0 %v741
      %776 = vmatpush1.bf16.msra.mxu0 %v740
      %777 = vmatprep.subr.bf16.mxu0 0
      %778 = vmatpush1.bf16.msra.mxu0 0
      %779 = vmatprep.subr.bf16.mxu0 0
      %780 = vmatpush1.bf16.msra.mxu0 0
      %781 = vmatprep.subr.bf16.mxu0 0
      %782 = vmatpush1.bf16.msra.mxu0 0
      %783 = vmatprep.subr.bf16.mxu0 0
      %784 = vmatpush1.bf16.msra.mxu0 0
      %785 = vmatprep.subr.bf16.mxu0 0
      %786 = vmatpush1.bf16.msra.mxu0 0
      %787 = vmatprep.subr.bf16.mxu0 0
      %788 = vmatpush1.bf16.msra.mxu0 0
      %789 = vmatprep.subr.bf16.mxu0 0
      %790 = vmatpush1.bf16.msra.mxu0 0
      %791 = vmatprep.subr.bf16.mxu0 0
      %792 = vmatpush1.bf16.msra.mxu0 0
      %793 = vmatprep.subr.bf16.mxu0 0
      %794 = vmatpush1.bf16.msra.mxu0 0
      %795 = vmatprep.subr.bf16.mxu0 0
      %796 = vmatpush1.bf16.msra.mxu0 0
      %797 = vmatprep.subr.bf16.mxu0 0
      %798 = vmatpush1.bf16.msra.mxu0 0
      %799 = vmatprep.subr.bf16.mxu0 0
      %800 = vmatpush1.bf16.msra.mxu0 0
      %801 = vmatprep.mubr.bf16.mxu0 0
      %802 = vmatmul.mubr.bf16.gmra.mrb[0].mxu0 %v761
      %v803 = vpop.f32.mrb[0].mxu0
      %v804 = vadd.f32 %v663, %v803
      %v805 = vpop.f32.mrb[0].mxu0
      %v806 = vadd.f32 %v667, %v805
      %v807 = vpop.f32.mrb[0].mxu0
      %v808 = vadd.f32 %v663, %v807
      %v809 = vpop.f32.mrb[0].mxu0
      %v810 = vadd.f32 %v667, %v809
      %811 = vmatprep.mubr.bf16.mxu0 0
      %812 = vmatmul.mubr.bf16.gmra.mrb[0].mxu0 %v763
      %v813 = vpop.f32.mrb[0].mxu0
      %v814 = vadd.f32 %v663, %v813
      %v815 = vpop.f32.mrb[0].mxu0
      %v816 = vadd.f32 %v667, %v815
      %v817 = vpop.f32.mrb[0].mxu0
      %v818 = vadd.f32 %v663, %v817
      %v819 = vpop.f32.mrb[0].mxu0
      %v820 = vadd.f32 %v667, %v819
      %821 = vmatprep.mubr.bf16.mxu0 0
      %822 = vmatmul.mubr.bf16.gmra.mrb[0].mxu0 %v765
      %v823 = vpop.f32.mrb[0].mxu0
      %v824 = vadd.f32 %v663, %v823
      %v825 = vpop.f32.mrb[0].mxu0
      %v826 = vadd.f32 %v667, %v825
      %v827 = vpop.f32.mrb[0].mxu0
      %v828 = vadd.f32 %v663, %v827
      %v829 = vpop.f32.mrb[0].mxu0
      %v830 = vadd.f32 %v667, %v829
      %831 = vmatprep.mubr.bf16.mxu0 0
      %832 = vmatmul.mubr.bf16.gmra.mrb[0].mxu0 %v767
      %v833 = vpop.f32.mrb[0].mxu0
      %v834 = vadd.f32 %v663, %v833
      %v835 = vpop.f32.mrb[0].mxu0
      %v836 = vadd.f32 %v667, %v835
      %v837 = vpop.f32.mrb[0].mxu0
      %v838 = vadd.f32 %v663, %v837
      %v839 = vpop.f32.mrb[0].mxu0
      %v840 = vadd.f32 %v667, %v839
      %841 = vdwg.mxu0
      %842 = vmatprep.subr.bf16.mxu0 %v731
      %843 = vmatpush1.bf16.msra.mxu0 %v730
      %844 = vmatprep.subr.bf16.mxu0 %v735
      %845 = vmatpush1.bf16.msra.mxu0 %v734
      %846 = vmatprep.subr.bf16.mxu0 %v739
      %847 = vmatpush1.bf16.msra.mxu0 %v738
      %848 = vmatprep.subr.bf16.mxu0 %v743
      %849 = vmatpush1.bf16.msra.mxu0 %v742
      %850 = vmatprep.subr.bf16.mxu0 0
      %851 = vmatpush1.bf16.msra.mxu0 0
      %852 = vmatprep.subr.bf16.mxu0 0
      %853 = vmatpush1.bf16.msra.mxu0 0
      %854 = vmatprep.subr.bf16.mxu0 0
      %855 = vmatpush1.bf16.msra.mxu0 0
      %856 = vmatprep.subr.bf16.mxu0 0
      %857 = vmatpush1.bf16.msra.mxu0 0
      %858 = vmatprep.subr.bf16.mxu0 0
      %859 = vmatpush1.bf16.msra.mxu0 0
      %860 = vmatprep.subr.bf16.mxu0 0
      %861 = vmatpush1.bf16.msra.mxu0 0
      %862 = vmatprep.subr.bf16.mxu0 0
      %863 = vmatpush1.bf16.msra.mxu0 0
      %864 = vmatprep.subr.bf16.mxu0 0
      %865 = vmatpush1.bf16.msra.mxu0 0
      %866 = vmatprep.subr.bf16.mxu0 0
      %867 = vmatpush1.bf16.msra.mxu0 0
      %868 = vmatprep.subr.bf16.mxu0 0
      %869 = vmatpush1.bf16.msra.mxu0 0
      %870 = vmatprep.subr.bf16.mxu0 0
      %871 = vmatpush1.bf16.msra.mxu0 0
      %872 = vmatprep.subr.bf16.mxu0 0
      %873 = vmatpush1.bf16.msra.mxu0 0
      %874 = vmatprep.mubr.bf16.mxu0 0
      %875 = vmatmul.mubr.bf16.gmra.mrb[0].mxu0 %v761
      %v876 = vpop.f32.mrb[0].mxu0
      %v877 = vadd.f32 %v671, %v876
      %v878 = vpop.f32.mrb[0].mxu0
      %v879 = vadd.f32 %v675, %v878
      %v880 = vpop.f32.mrb[0].mxu0
      %v881 = vadd.f32 %v671, %v880
      %v882 = vpop.f32.mrb[0].mxu0
      %v883 = vadd.f32 %v675, %v882
      %884 = vmatprep.mubr.bf16.mxu0 0
      %885 = vmatmul.mubr.bf16.gmra.mrb[0].mxu0 %v763
      %v886 = vpop.f32.mrb[0].mxu0
      %v887 = vadd.f32 %v671, %v886
      %v888 = vpop.f32.mrb[0].mxu0
      %v889 = vadd.f32 %v675, %v888
      %v890 = vpop.f32.mrb[0].mxu0
      %v891 = vadd.f32 %v671, %v890
      %v892 = vpop.f32.mrb[0].mxu0
      %v893 = vadd.f32 %v675, %v892
      %894 = vmatprep.mubr.bf16.mxu0 0
      %895 = vmatmul.mubr.bf16.gmra.mrb[0].mxu0 %v765
      %v896 = vpop.f32.mrb[0].mxu0
      %v897 = vadd.f32 %v671, %v896
      %v898 = vpop.f32.mrb[0].mxu0
      %v899 = vadd.f32 %v675, %v898
      %v900 = vpop.f32.mrb[0].mxu0
      %v901 = vadd.f32 %v671, %v900
      %v902 = vpop.f32.mrb[0].mxu0
      %v903 = vadd.f32 %v675, %v902
      %904 = vmatprep.mubr.bf16.mxu0 0
      %905 = vmatmul.mubr.bf16.gmra.mrb[0].mxu0 %v767
      %v906 = vpop.f32.mrb[0].mxu0
      %v907 = vadd.f32 %v671, %v906
      %v908 = vpop.f32.mrb[0].mxu0
      %v909 = vadd.f32 %v675, %v908
      %v910 = vpop.f32.mrb[0].mxu0
      %v911 = vadd.f32 %v671, %v910
      %v912 = vpop.f32.mrb[0].mxu0
      %v913 = vadd.f32 %v675, %v912
      %914 = vdwg.mxu0
      %v915 = vmax.f32 %v804, 0.0
      %v916 = vmax.f32 %v806, 0.0
      %v917 = vmax.f32 %v877, 0.0
      %v918 = vmax.f32 %v879, 0.0
      %v919 = vmax.f32 %v808, 0.0
      %v920 = vmax.f32 %v810, 0.0
      %v921 = vmax.f32 %v881, 0.0
      %v922 = vmax.f32 %v883, 0.0
      %v923 = vmax.f32 %v814, 0.0
      %v924 = vmax.f32 %v816, 0.0
      %v925 = vmax.f32 %v887, 0.0
      %v926 = vmax.f32 %v889, 0.0
      %v927 = vmax.f32 %v818, 0.0
      %v928 = vmax.f32 %v820, 0.0
      %v929 = vmax.f32 %v891, 0.0
      %v930 = vmax.f32 %v893, 0.0
      %v931 = vmax.f32 %v824, 0.0
      %v932 = vmax.f32 %v826, 0.0
      %v933 = vmax.f32 %v897, 0.0
      %v934 = vmax.f32 %v899, 0.0
      %v935 = vmax.f32 %v828, 0.0
      %v936 = vmax.f32 %v830, 0.0
      %v937 = vmax.f32 %v901, 0.0
      %v938 = vmax.f32 %v903, 0.0
      %v939 = vmax.f32 %v834, 0.0
      %v940 = vmax.f32 %v836, 0.0
      %v941 = vmax.f32 %v907, 0.0
      %v942 = vmax.f32 %v909, 0.0
      %v943 = vmax.f32 %v838, 0.0
      %v944 = vmax.f32 %v840, 0.0
      %v945 = vmax.f32 %v911, 0.0
      %v946 = vmax.f32 %v913, 0.0
      %v947 = vpack.c.bf16 %v919, %v915
      %v948 = vpack.c.bf16 %v920, %v916
      %v949 = vpack.c.bf16 %v921, %v917
      %v950 = vpack.c.bf16 %v922, %v918
      %v951 = vpack.c.bf16 %v927, %v923
      %v952 = vpack.c.bf16 %v928, %v924
      %v953 = vpack.c.bf16 %v929, %v925
      %v954 = vpack.c.bf16 %v930, %v926
      %v955 = vpack.c.bf16 %v935, %v931
      %v956 = vpack.c.bf16 %v936, %v932
      %v957 = vpack.c.bf16 %v937, %v933
      %v958 = vpack.c.bf16 %v938, %v934
      %v959 = vpack.c.bf16 %v943, %v939
      %v960 = vpack.c.bf16 %v944, %v940
      %v961 = vpack.c.bf16 %v945, %v941
      %v962 = vpack.c.bf16 %v946, %v942
      %v963 = vld [vmem:[%s3] sm:$0xf]
      %v964 = vld [vmem:[%s3 + $0x4] sm:$0xf]
      %v965 = vld [vmem:[%s3 + $0x8] sm:$0xf]
      %v966 = vld [vmem:[%s3 + $0xc] sm:$0xf]
      %v967 = vld [vmem:[%s3 + $0x10] sm:$0xf]
      %v968 = vld [vmem:[%s3 + $0x14] sm:$0xf]
      %v969 = vld [vmem:[%s3 + $0x18] sm:$0xf]
      %v970 = vld [vmem:[%s3 + $0x1c] sm:$0xf]
      %v971 = vld [vmem:[%s3 + $0x20] sm:$0xf]
      %v972 = vld [vmem:[%s3 + $0x24] sm:$0xf]
      %v973 = vld [vmem:[%s3 + $0x28] sm:$0xf]
      %v974 = vld [vmem:[%s3 + $0x2c] sm:$0xf]
      %v975 = vld [vmem:[%s3 + $0x30] sm:$0xf]
      %v976 = vld [vmem:[%s3 + $0x34] sm:$0xf]
      %v977 = vld [vmem:[%s3 + $0x38] sm:$0xf]
      %v978 = vld [vmem:[%s3 + $0x3c] sm:$0xf]
      %v979 = vld [vmem:[%s3 + $0x40] sm:$0xf]
      %v980 = vld [vmem:[%s3 + $0x44] sm:$0xf]
      %v981 = vld [vmem:[%s3 + $0x48] sm:$0xf]
      %v982 = vld [vmem:[%s3 + $0x4c] sm:$0xf]
      %v983 = vld [vmem:[%s3 + $0x50] sm:$0xf]
      %v984 = vld [vmem:[%s3 + $0x54] sm:$0xf]
      %v985 = vld [vmem:[%s3 + $0x58] sm:$0xf]
      %v986 = vld [vmem:[%s3 + $0x5c] sm:$0xf]
      %v987 = vld [vmem:[%s3 + $0x60] sm:$0xf]
      %v988 = vld [vmem:[%s3 + $0x64] sm:$0xf]
      %v989 = vld [vmem:[%s3 + $0x68] sm:$0xf]
      %v990 = vld [vmem:[%s3 + $0x6c] sm:$0xf]
      %v991 = vld [vmem:[%s3 + $0x70] sm:$0xf]
      %v992 = vld [vmem:[%s3 + $0x74] sm:$0xf]
      %v993 = vld [vmem:[%s3 + $0x78] sm:$0xf]
      %v994 = vld [vmem:[%s3 + $0x7c] sm:$0xf]
      %v995 = vld [vmem:[%s3 + $0x80] sm:$0xf]
      %v996 = vld [vmem:[%s3 + $0x84] sm:$0xf]
      %v997 = vld [vmem:[%s3 + $0x88] sm:$0xf]
      %v998 = vld [vmem:[%s3 + $0x8c] sm:$0xf]
      %v999 = vld [vmem:[%s3 + $0x90] sm:$0xf]
      %v1000 = vld [vmem:[%s3 + $0x94] sm:$0xf]
      %v1001 = vld [vmem:[%s3 + $0x98] sm:$0xf]
      %v1002 = vld [vmem:[%s3 + $0x9c] sm:$0xf]
      %v1003 = vld [vmem:[%s3 + $0xa0] sm:$0xf]
      %v1004 = vld [vmem:[%s3 + $0xa4] sm:$0xf]
      %v1005 = vld [vmem:[%s3 + $0xa8] sm:$0xf]
      %v1006 = vld [vmem:[%s3 + $0xac] sm:$0xf]
      %v1007 = vld [vmem:[%s3 + $0xb0] sm:$0xf]
      %v1008 = vld [vmem:[%s3 + $0xb4] sm:$0xf]
      %v1009 = vld [vmem:[%s3 + $0xb8] sm:$0xf]
      %v1010 = vld [vmem:[%s3 + $0xbc] sm:$0xf]
      %v1011 = vld [vmem:[%s3 + $0xc0] sm:$0xf]
      %v1012 = vld [vmem:[%s3 + $0xc4] sm:$0xf]
      %v1013 = vld [vmem:[%s3 + $0xc8] sm:$0xf]
      %v1014 = vld [vmem:[%s3 + $0xcc] sm:$0xf]
      %v1015 = vld [vmem:[%s3 + $0xd0] sm:$0xf]
      %v1016 = vld [vmem:[%s3 + $0xd4] sm:$0xf]
      %v1017 = vld [vmem:[%s3 + $0xd8] sm:$0xf]
      %v1018 = vld [vmem:[%s3 + $0xdc] sm:$0xf]
      %v1019 = vld [vmem:[%s3 + $0xe0] sm:$0xf]
      %v1020 = vld [vmem:[%s3 + $0xe4] sm:$0xf]
      %v1021 = vld [vmem:[%s3 + $0xe8] sm:$0xf]
      %v1022 = vld [vmem:[%s3 + $0xec] sm:$0xf]
      %v1023 = vld [vmem:[%s3 + $0xf0] sm:$0xf]
      %v1024 = vld [vmem:[%s3 + $0xf4] sm:$0xf]
      %v1025 = vld [vmem:[%s3 + $0xf8] sm:$0xf]
      %v1026 = vld [vmem:[%s3 + $0xfc] sm:$0xf]
      %v1027 = vld [vmem:[%s4] sm:$0x1]
      %v1029 = vlaneseq
      %v1030 = vshrl.u32 %v1029, 7
      %v1031 = vsub.s32 0, %v1030
      %v1032 = vrot.slane %v1027, %v1031
      %v1098 = vunpack.c.l.b16 %v963
      %v1099 = vunpack.c.l.b16 %v964
      %v1100 = vunpack.c.l.b16 %v965
      %v1101 = vunpack.c.l.b16 %v966
      %v1102 = vunpack.c.l.b16 %v967
      %v1103 = vunpack.c.l.b16 %v968
      %v1104 = vunpack.c.l.b16 %v969
      %v1105 = vunpack.c.l.b16 %v970
      %v1106 = vunpack.c.l.b16 %v971
      %v1107 = vunpack.c.l.b16 %v972
      %v1108 = vunpack.c.l.b16 %v973
      %v1109 = vunpack.c.l.b16 %v974
      %v1110 = vunpack.c.l.b16 %v975
      %v1111 = vunpack.c.l.b16 %v976
      %v1112 = vunpack.c.l.b16 %v977
      %v1113 = vunpack.c.l.b16 %v978
      %v1114 = vunpack.c.l.b16 %v979
      %v1115 = vunpack.c.l.b16 %v980
      %v1116 = vunpack.c.l.b16 %v981
      %v1117 = vunpack.c.l.b16 %v982
      %v1118 = vunpack.c.l.b16 %v983
      %v1119 = vunpack.c.l.b16 %v984
      %v1120 = vunpack.c.l.b16 %v985
      %v1121 = vunpack.c.l.b16 %v986
      %v1122 = vunpack.c.l.b16 %v987
      %v1123 = vunpack.c.l.b16 %v988
      %v1124 = vunpack.c.l.b16 %v989
      %v1125 = vunpack.c.l.b16 %v990
      %v1126 = vunpack.c.l.b16 %v991
      %v1127 = vunpack.c.l.b16 %v992
      %v1128 = vunpack.c.l.b16 %v993
      %v1129 = vunpack.c.l.b16 %v994
      %v1130 = vunpack.c.l.b16 %v995
      %v1131 = vunpack.c.l.b16 %v996
      %v1132 = vunpack.c.l.b16 %v997
      %v1133 = vunpack.c.l.b16 %v998
      %v1134 = vunpack.c.l.b16 %v999
      %v1135 = vunpack.c.l.b16 %v1000
      %v1136 = vunpack.c.l.b16 %v1001
      %v1137 = vunpack.c.l.b16 %v1002
      %v1138 = vunpack.c.l.b16 %v1003
      %v1139 = vunpack.c.l.b16 %v1004
      %v1140 = vunpack.c.l.b16 %v1005
      %v1141 = vunpack.c.l.b16 %v1006
      %v1142 = vunpack.c.l.b16 %v1007
      %v1143 = vunpack.c.l.b16 %v1008
      %v1144 = vunpack.c.l.b16 %v1009
      %v1145 = vunpack.c.l.b16 %v1010
      %v1146 = vunpack.c.l.b16 %v1011
      %v1147 = vunpack.c.l.b16 %v1012
      %v1148 = vunpack.c.l.b16 %v1013
      %v1149 = vunpack.c.l.b16 %v1014
      %v1150 = vunpack.c.l.b16 %v1015
      %v1151 = vunpack.c.l.b16 %v1016
      %v1152 = vunpack.c.l.b16 %v1017
      %v1153 = vunpack.c.l.b16 %v1018
      %v1154 = vunpack.c.l.b16 %v1019
      %v1155 = vunpack.c.l.b16 %v1020
      %v1156 = vunpack.c.l.b16 %v1021
      %v1157 = vunpack.c.l.b16 %v1022
      %v1158 = vunpack.c.l.b16 %v1023
      %v1159 = vunpack.c.l.b16 %v1024
      %v1160 = vunpack.c.l.b16 %v1025
      %v1161 = vunpack.c.l.b16 %v1026
      %v1162 = vpack.c.b16 %v1099, %v1098
      %v1163 = vpack.c.b16 %v1101, %v1100
      %v1164 = vpack.c.b16 %v1103, %v1102
      %v1165 = vpack.c.b16 %v1105, %v1104
      %v1166 = vpack.c.b16 %v1107, %v1106
      %v1167 = vpack.c.b16 %v1109, %v1108
      %v1168 = vpack.c.b16 %v1111, %v1110
      %v1169 = vpack.c.b16 %v1113, %v1112
      %v1170 = vpack.c.b16 %v1115, %v1114
      %v1171 = vpack.c.b16 %v1117, %v1116
      %v1172 = vpack.c.b16 %v1119, %v1118
      %v1173 = vpack.c.b16 %v1121, %v1120
      %v1174 = vpack.c.b16 %v1123, %v1122
      %v1175 = vpack.c.b16 %v1125, %v1124
      %v1176 = vpack.c.b16 %v1127, %v1126
      %v1177 = vpack.c.b16 %v1129, %v1128
      %v1178 = vpack.c.b16 %v1131, %v1130
      %v1179 = vpack.c.b16 %v1133, %v1132
      %v1180 = vpack.c.b16 %v1135, %v1134
      %v1181 = vpack.c.b16 %v1137, %v1136
      %v1182 = vpack.c.b16 %v1139, %v1138
      %v1183 = vpack.c.b16 %v1141, %v1140
      %v1184 = vpack.c.b16 %v1143, %v1142
      %v1185 = vpack.c.b16 %v1145, %v1144
      %v1186 = vpack.c.b16 %v1147, %v1146
      %v1187 = vpack.c.b16 %v1149, %v1148
      %v1188 = vpack.c.b16 %v1151, %v1150
      %v1189 = vpack.c.b16 %v1153, %v1152
      %v1190 = vpack.c.b16 %v1155, %v1154
      %v1191 = vpack.c.b16 %v1157, %v1156
      %v1192 = vpack.c.b16 %v1159, %v1158
      %v1193 = vpack.c.b16 %v1161, %v1160
      %1226 = vmatprep.subr.bf16.mxu0 0
      %1227 = vmatpush1.bf16.msra.mxu0 %v1162
      %1228 = vmatprep.subr.bf16.mxu0 0
      %1229 = vmatpush1.bf16.msra.mxu0 %v1163
      %1230 = vmatprep.subr.bf16.mxu0 0
      %1231 = vmatpush1.bf16.msra.mxu0 %v1164
      %1232 = vmatprep.subr.bf16.mxu0 0
      %1233 = vmatpush1.bf16.msra.mxu0 %v1165
      %1234 = vmatprep.subr.bf16.mxu0 0
      %1235 = vmatpush1.bf16.msra.mxu0 %v1166
      %1236 = vmatprep.subr.bf16.mxu0 0
      %1237 = vmatpush1.bf16.msra.mxu0 %v1167
      %1238 = vmatprep.subr.bf16.mxu0 0
      %1239 = vmatpush1.bf16.msra.mxu0 %v1168
      %1240 = vmatprep.subr.bf16.mxu0 0
      %1241 = vmatpush1.bf16.msra.mxu0 %v1169
      %1242 = vmatprep.subr.bf16.mxu0 0
      %1243 = vmatpush1.bf16.msra.mxu0 %v1170
      %1244 = vmatprep.subr.bf16.mxu0 0
      %1245 = vmatpush1.bf16.msra.mxu0 %v1171
      %1246 = vmatprep.subr.bf16.mxu0 0
      %1247 = vmatpush1.bf16.msra.mxu0 %v1172
      %1248 = vmatprep.subr.bf16.mxu0 0
      %1249 = vmatpush1.bf16.msra.mxu0 %v1173
      %1250 = vmatprep.subr.bf16.mxu0 0
      %1251 = vmatpush1.bf16.msra.mxu0 %v1174
      %1252 = vmatprep.subr.bf16.mxu0 0
      %1253 = vmatpush1.bf16.msra.mxu0 %v1175
      %1254 = vmatprep.subr.bf16.mxu0 0
      %1255 = vmatpush1.bf16.msra.mxu0 %v1176
      %1256 = vmatprep.subr.bf16.mxu0 0
      %1257 = vmatpush1.bf16.msra.mxu0 %v1177
      %1258 = vmatprep.mubr.bf16.mxu0 %v948
      %1259 = vmatmul.mubr.bf16.gmra.mrb[0].mxu0 %v947
      %v1260 = vpop.f32.mrb[0].mxu0
      %v1261 = vadd.f32 %v1032, %v1260
      %v1262 = vpop.f32.mrb[0].mxu0
      %v1263 = vpop.f32.mrb[0].mxu0
      %v1264 = vadd.f32 %v1032, %v1263
      %v1265 = vpop.f32.mrb[0].mxu0
      %1266 = vmatprep.mubr.bf16.mxu0 %v952
      %1267 = vmatmul.mubr.bf16.gmra.mrb[0].mxu0 %v951
      %v1268 = vpop.f32.mrb[0].mxu0
      %v1269 = vadd.f32 %v1032, %v1268
      %v1270 = vpop.f32.mrb[0].mxu0
      %v1271 = vpop.f32.mrb[0].mxu0
      %v1272 = vadd.f32 %v1032, %v1271
      %v1273 = vpop.f32.mrb[0].mxu0
      %1274 = vmatprep.mubr.bf16.mxu0 %v956
      %1275 = vmatmul.mubr.bf16.gmra.mrb[0].mxu0 %v955
      %v1276 = vpop.f32.mrb[0].mxu0
      %v1277 = vadd.f32 %v1032, %v1276
      %v1278 = vpop.f32.mrb[0].mxu0
      %v1279 = vpop.f32.mrb[0].mxu0
      %v1280 = vadd.f32 %v1032, %v1279
      %v1281 = vpop.f32.mrb[0].mxu0
      %1282 = vmatprep.mubr.bf16.mxu0 %v960
      %1283 = vmatmul.mubr.bf16.gmra.mrb[0].mxu0 %v959
      %v1284 = vpop.f32.mrb[0].mxu0
      %v1285 = vadd.f32 %v1032, %v1284
      %v1286 = vpop.f32.mrb[0].mxu0
      %v1287 = vpop.f32.mrb[0].mxu0
      %v1288 = vadd.f32 %v1032, %v1287
      %v1289 = vpop.f32.mrb[0].mxu0
      %1290 = vdwg.mxu0
      %1291 = vmatprep.subr.bf16.mxu0 0
      %1292 = vmatpush1.bf16.msra.mxu0 %v1178
      %1293 = vmatprep.subr.bf16.mxu0 0
      %1294 = vmatpush1.bf16.msra.mxu0 %v1179
      %1295 = vmatprep.subr.bf16.mxu0 0
      %1296 = vmatpush1.bf16.msra.mxu0 %v1180
      %1297 = vmatprep.subr.bf16.mxu0 0
      %1298 = vmatpush1.bf16.msra.mxu0 %v1181
      %1299 = vmatprep.subr.bf16.mxu0 0
      %1300 = vmatpush1.bf16.msra.mxu0 %v1182
      %1301 = vmatprep.subr.bf16.mxu0 0
      %1302 = vmatpush1.bf16.msra.mxu0 %v1183
      %1303 = vmatprep.subr.bf16.mxu0 0
      %1304 = vmatpush1.bf16.msra.mxu0 %v1184
      %1305 = vmatprep.subr.bf16.mxu0 0
      %1306 = vmatpush1.bf16.msra.mxu0 %v1185
      %1307 = vmatprep.subr.bf16.mxu0 0
      %1308 = vmatpush1.bf16.msra.mxu0 %v1186
      %1309 = vmatprep.subr.bf16.mxu0 0
      %1310 = vmatpush1.bf16.msra.mxu0 %v1187
      %1311 = vmatprep.subr.bf16.mxu0 0
      %1312 = vmatpush1.bf16.msra.mxu0 %v1188
      %1313 = vmatprep.subr.bf16.mxu0 0
      %1314 = vmatpush1.bf16.msra.mxu0 %v1189
      %1315 = vmatprep.subr.bf16.mxu0 0
      %1316 = vmatpush1.bf16.msra.mxu0 %v1190
      %1317 = vmatprep.subr.bf16.mxu0 0
      %1318 = vmatpush1.bf16.msra.mxu0 %v1191
      %1319 = vmatprep.subr.bf16.mxu0 0
      %1320 = vmatpush1.bf16.msra.mxu0 %v1192
      %1321 = vmatprep.subr.bf16.mxu0 0
      %1322 = vmatpush1.bf16.msra.mxu0 %v1193
      %1323 = vmatprep.mubr.bf16.mxu0 %v950
      %1324 = vmatmul.mubr.bf16.gmra.mrb[0].mxu0 %v949
      %v1325 = vpop.f32.mrb[0].mxu0
      %v1326 = vadd.f32 %v1261, %v1325
      %v1327 = vpop.f32.mrb[0].mxu0
      %v1328 = vpop.f32.mrb[0].mxu0
      %v1329 = vadd.f32 %v1264, %v1328
      %v1330 = vpop.f32.mrb[0].mxu0
      %1331 = vmatprep.mubr.bf16.mxu0 %v954
      %1332 = vmatmul.mubr.bf16.gmra.mrb[0].mxu0 %v953
      %v1333 = vpop.f32.mrb[0].mxu0
      %v1334 = vadd.f32 %v1269, %v1333
      %v1335 = vpop.f32.mrb[0].mxu0
      %v1336 = vpop.f32.mrb[0].mxu0
      %v1337 = vadd.f32 %v1272, %v1336
      %v1338 = vpop.f32.mrb[0].mxu0
      %1339 = vmatprep.mubr.bf16.mxu0 %v958
      %1340 = vmatmul.mubr.bf16.gmra.mrb[0].mxu0 %v957
      %v1341 = vpop.f32.mrb[0].mxu0
      %v1342 = vadd.f32 %v1277, %v1341
      %v1343 = vpop.f32.mrb[0].mxu0
      %v1344 = vpop.f32.mrb[0].mxu0
      %v1345 = vadd.f32 %v1280, %v1344
      %v1346 = vpop.f32.mrb[0].mxu0
      %1347 = vmatprep.mubr.bf16.mxu0 %v962
      %1348 = vmatmul.mubr.bf16.gmra.mrb[0].mxu0 %v961
      %v1349 = vpop.f32.mrb[0].mxu0
      %v1350 = vadd.f32 %v1285, %v1349
      %v1351 = vpop.f32.mrb[0].mxu0
      %v1352 = vpop.f32.mrb[0].mxu0
      %v1353 = vadd.f32 %v1288, %v1352
      %v1354 = vpop.f32.mrb[0].mxu0
      %1355 = vdwg.mxu0
      %v1356 = vpack.c.bf16 %v1329, %v1326
      %v1357 = vpack.c.bf16 %v1337, %v1334
      %v1358 = vpack.c.bf16 %v1345, %v1342
      %v1359 = vpack.c.bf16 %v1353, %v1350
      %v1364 = vunpack.c.l.b16 %v1356
      %v1365 = vunpack.c.h.b16 %v1356
      %v1366 = vunpack.c.l.b16 %v1357
      %v1367 = vunpack.c.h.b16 %v1357
      %v1368 = vunpack.c.l.b16 %v1358
      %v1369 = vunpack.c.h.b16 %v1358
      %v1370 = vunpack.c.l.b16 %v1359
      %v1371 = vunpack.c.h.b16 %v1359
      %v1372 = vpack.c.b16 %v1364, %v1364
      %v1373 = vpack.c.b16 %v1365, %v1365
      %v1374 = vpack.c.b16 %v1366, %v1366
      %v1375 = vpack.c.b16 %v1367, %v1367
      %v1376 = vpack.c.b16 %v1368, %v1368
      %v1377 = vpack.c.b16 %v1369, %v1369
      %v1378 = vpack.c.b16 %v1370, %v1370
      %v1379 = vpack.c.b16 %v1371, %v1371
      %vm1388 = vcmask 60416
      %1389 = vst.msk [vmem:[%s260] sm:$0xf] %vm1388, %v1372
      %1390 = vst.msk [vmem:[%s260 + $0x4] sm:$0xf] %vm1388, %v1373
      %1391 = vst.msk [vmem:[%s260 + $0x8] sm:$0xf] %vm1388, %v1374
      %1392 = vst.msk [vmem:[%s260 + $0xc] sm:$0xf] %vm1388, %v1375
      %1393 = vst.msk [vmem:[%s260 + $0x10] sm:$0xf] %vm1388, %v1376
      %1394 = vst.msk [vmem:[%s260 + $0x14] sm:$0xf] %vm1388, %v1377
      %1395 = vst.msk [vmem:[%s260 + $0x18] sm:$0xf] %vm1388, %v1378
      %1396 = vst.msk [vmem:[%s260 + $0x1c] sm:$0xf] %vm1388, %v1379
      %s1397 = smul.u32 8, %s21
      %p1398 = scmp.lt.s32.totalorder %s20, 1
      %s1399 = scalar_select %p1398, %s20, 1
      %p1400 = scmp.lt.s32.totalorder %s1397, 7
      %s1401 = scalar_select %p1400, %s1397, 7
      %s1402 = smul.addr %s1399, 8
      %s1403 = sadd.s32 %s1401, %s1402
      %s1404 = smul.addr %s1403, 4
      %s1405 = scalar_lea.vmem %s5, %s1404
      // Predicated region
      $region41: #{downsample_pallas.1} parent=39 // pred_check
        %p1406 = pneg %p160
      $region42: #{downsample_pallas.1} parent=39 // pred_check_branch
        %1408 = sbr.rel (%p1406) target = $region44
      $region43: #{downsample_pallas.1} parent=39 // pred_region
        %s1409 = smul.u32 8, %s21
      $region44: #{downsample_pallas.1} parent=39 // pred_fallthru
        _
    $region40: #{downsample_pallas.1} parent=5 // pred_fallthru
      _
    %p1410 = scmp.le.s32.totalorder 2, %s11
    // Predicated region
    $region45: #{downsample_pallas.1} parent=5 // pred_check
      %p1411 = pneg %p1410
    $region46: #{downsample_pallas.1} parent=5 // pred_check_branch
      %1413 = sbr.rel (%p1411) target = $region48
    $region47: #{downsample_pallas.1} parent=5 // pred_region
      %s1414 = ssub.s32 %s11, 2
      // Predicated region
      $region49: #{downsample_pallas.1} parent=47 // pred_check
        %p1415 = pneg %p166
      $region50: #{downsample_pallas.1} parent=47 // pred_check_branch
        %1417 = sbr.rel (%p1415) target = $region52
      $region51: #{downsample_pallas.1} parent=47 // pred_region
        %s1418 = smul.u32 8, %s23
        %p1419 = scmp.lt.s32.totalorder %s22, 1
        %s1420 = scalar_select %p1419, %s22, 1
        %p1421 = scmp.lt.s32.totalorder %s1418, 7
        %s1422 = scalar_select %p1421, %s1418, 7
        %s1423 = smul.addr %s1420, 8
        %s1424 = sadd.s32 %s1422, %s1423
        %s1425 = smul.addr %s1424, 4
        %s1426 = scalar_lea.vmem %s5, %s1425
      $region52: #{downsample_pallas.1} parent=47 // pred_fallthru
        _
    $region48: #{downsample_pallas.1} parent=5 // pred_fallthru
      _
  $region6: #{downsample_pallas.1} parent=0 // loop_footer
    %s15 = sadd.s32 1, %s11
  $region7: #{downsample_pallas.1} parent=0 // loop_footer_branch
    %10 = sbr.rel target = $region3
  $region8: #{downsample_pallas.1} parent=0 // loop_exit
    _

</llo_original>
